<compile_context>
chip_gen: v7x
topology: tpu7x:2x2x1
jax: 0.10.0
libtpu: 0.0.40
codegen_flags: <defaults>
</compile_context>

<pallas_src>
import jax
import jax.numpy as jnp
from jax.experimental import pallas as pl
from jax.experimental.pallas import tpu as pltpu


def _fused_linear_kernel(x_ref, w_ref, b_ref, o_ref):
    # x_ref: (B, D_in)            bf16
    # w_ref: (D_in, 4*D_out)      bf16  (all four heads concatenated on N)
    # b_ref: (1, 4*D_out)         f32
    # o_ref: (B, 4*D_out)         f32   lane-dense output slab
    y = jnp.dot(x_ref[...], w_ref[...], preferred_element_type=jnp.float32)
    o_ref[...] = (y + b_ref[...]).astype(o_ref.dtype)


def pos_cnn_forward(x, w_stack, b_stack):
    """x: (B, D_in); w_stack: (4, D_in, D_out); b_stack: (4, 1, D_out).

    Returns the 4-tuple (x1, x2, x3, x4) exactly like PosCNN.forward.
    """
    B, D_in = x.shape
    n_heads, _, D_out = w_stack.shape
    N = n_heads * D_out

    # Wrapper-side layout plumbing: concatenate the heads along the output
    # (lane) dimension so the kernel is a single wide matmul.
    w_cat = jnp.transpose(w_stack, (1, 0, 2)).reshape(D_in, N)
    b_cat = b_stack.reshape(1, N).astype(jnp.float32)

    # bf16 inputs, f32 accumulation on the MXU.
    x_bf16 = x.astype(jnp.bfloat16)
    w_bf16 = w_cat.astype(jnp.bfloat16)

    cost = pl.CostEstimate(
        flops=2 * B * D_in * N,
        transcendentals=0,
        bytes_accessed=(x_bf16.size * 2 + w_bf16.size * 2
                        + b_cat.size * 4 + B * N * 4),
    )

    out = pl.pallas_call(
        _fused_linear_kernel,
        out_shape=jax.ShapeDtypeStruct((B, N), jnp.float32),
        grid=(1,),
        in_specs=[
            pl.BlockSpec((B, D_in), lambda i: (0, 0)),   # x (shared)
            pl.BlockSpec((D_in, N), lambda i: (0, 0)),   # W_cat
            pl.BlockSpec((1, N), lambda i: (0, 0)),      # b_cat
        ],
        out_specs=pl.BlockSpec((B, N), lambda i: (0, 0)),
        compiler_params=pltpu.CompilerParams(
            dimension_semantics=("arbitrary",)),
        cost_estimate=cost,
    )(x_bf16, w_bf16, b_cat)

    # Static contiguous slices of the lane-dense fused output (nearly free),
    # preserving the (x1, x2, x3, x4) return signature.
    return tuple(out[:, i * D_out:(i + 1) * D_out] for i in range(n_heads))


def _xavier_uniform(key, shape):
    # shape = (D_in, D_out) -> fan_in = D_in, fan_out = D_out
    fan_in, fan_out = shape
    limit = jnp.sqrt(6.0 / (fan_in + fan_out))
    return jax.random.uniform(key, shape, jnp.float32, -limit, limit)


if __name__ == "__main__":
    key = jax.random.PRNGKey(0)
    B, D_in, D_out, N_HEADS = 8, 128, 128, 4

    kx, *kws = jax.random.split(key, 1 + N_HEADS)
    x = jax.random.normal(kx, (B, D_in), jnp.float32)

    # Deterministic parameter init (xavier-uniform weights, bias = 0.01),
    # mirroring the Linear branch of PosCNN._initialize_weights.
    w_stack = jnp.stack([_xavier_uniform(k, (D_in, D_out)) for k in kws])
    b_stack = jnp.full((N_HEADS, 1, D_out), 0.01, jnp.float32)

    outs = pos_cnn_forward(x, w_stack, b_stack)
    outs = jax.block_until_ready(outs)

    # Reference check in plain JAX (f32).  Tolerance loosened because the
    # kernel uses bf16 inputs (f32 accumulation).
    for i in range(N_HEADS):
        ref = x @ w_stack[i] + b_stack[i]
        assert outs[i].shape == (B, D_out)
        assert jnp.allclose(outs[i], ref, atol=5e-2, rtol=5e-2), (
            f"head {i} mismatch: max abs err "
            f"{jnp.max(jnp.abs(outs[i] - ref))}")

    print("KERNEL_OK")
</pallas_src>

<mosaic_0001>
module attributes {stable_mosaic.version = 11 : i64} {
  func.func @_fused_linear_kernel(%arg0: i32, %arg1: memref<8x128xbf16, #tpu.memory_space<vmem>>, %arg2: memref<128x512xbf16, #tpu.memory_space<vmem>>, %arg3: memref<1x512xf32, #tpu.memory_space<vmem>>, %arg4: memref<8x512xf32, #tpu.memory_space<vmem>>) attributes {dimension_semantics = [#tpu.dimension_semantics<arbitrary>], iteration_bounds = array<i64: 1>, scalar_prefetch = 0 : i64, scratch_operands = 0 : i64, tpu.core_type = #tpu.core_type<tc>, window_params = [{pipeline_mode = #tpu.pipeline_mode<synchronous>, transform_indices = @transform_0, window_bounds = array<i64: 8, 128>}, {pipeline_mode = #tpu.pipeline_mode<synchronous>, transform_indices = @transform_1, window_bounds = array<i64: 128, 512>}, {pipeline_mode = #tpu.pipeline_mode<synchronous>, transform_indices = @transform_2, window_bounds = array<i64: 1, 512>}, {pipeline_mode = #tpu.pipeline_mode<synchronous>, transform_indices = @transform_3, window_bounds = array<i64: 8, 512>}]} {
    %c0 = arith.constant 0 : index
    %c0_0 = arith.constant 0 : index
    %0 = vector.load %arg1[%c0, %c0_0] : memref<8x128xbf16, #tpu.memory_space<vmem>>, vector<8x128xbf16>
    %c0_1 = arith.constant 0 : index
    %c0_2 = arith.constant 0 : index
    %1 = vector.load %arg2[%c0_1, %c0_2] : memref<128x512xbf16, #tpu.memory_space<vmem>>, vector<128x512xbf16>
    %cst = arith.constant dense<0.000000e+00> : vector<8x512xf32>
    %2 = tpu.matmul %0, %1, %cst {dimension_numbers = #tpu.dot_dimension_numbers<[1], [0], [0], [1], [0, 0, 1, 1], [], []>} : vector<8x128xbf16>, vector<128x512xbf16>, vector<8x512xf32> -> vector<8x512xf32>
    %c0_3 = arith.constant 0 : index
    %c0_4 = arith.constant 0 : index
    %3 = vector.load %arg3[%c0_3, %c0_4] : memref<1x512xf32, #tpu.memory_space<vmem>>, vector<1x512xf32>
    %4 = vector.broadcast %3 : vector<1x512xf32> to vector<8x512xf32>
    %5 = arith.addf %2, %4 : vector<8x512xf32>
    %c0_5 = arith.constant 0 : index
    %c0_6 = arith.constant 0 : index
    %6 = vector.load %arg4[%c0_5, %c0_6] : memref<8x512xf32, #tpu.memory_space<vmem>>, vector<8x512xf32>
    tpu.vector_store %arg4[%c0_5, %c0_6], %5 {strides = array<i32>} : memref<8x512xf32, #tpu.memory_space<vmem>>, vector<8x512xf32>,
    return
  }
  func.func @transform_0(%arg0: i32) -> (i32, i32) {
    %c0_i32 = arith.constant 0 : i32
    %c0_i32_0 = arith.constant 0 : i32
    %c0_i32_1 = arith.constant 0 : i32
    return %c0_i32, %c0_i32_0 : i32, i32
  }
  func.func @transform_1(%arg0: i32) -> (i32, i32) {
    %c0_i32 = arith.constant 0 : i32
    %c0_i32_0 = arith.constant 0 : i32
    %c0_i32_1 = arith.constant 0 : i32
    return %c0_i32, %c0_i32_0 : i32, i32
  }
  func.func @transform_2(%arg0: i32) -> (i32, i32) {
    %c0_i32 = arith.constant 0 : i32
    %c0_i32_0 = arith.constant 0 : i32
    %c0_i32_1 = arith.constant 0 : i32
    return %c0_i32, %c0_i32_0 : i32, i32
  }
  func.func @transform_3(%arg0: i32) -> (i32, i32) {
    %c0_i32 = arith.constant 0 : i32
    %c0_i32_0 = arith.constant 0 : i32
    %c0_i32_1 = arith.constant 0 : i32
    return %c0_i32, %c0_i32_0 : i32, i32
  }
}

</mosaic_0001>

<llo_original>
// kernel: tpu_custom_call.1
$region0: #{tpu_custom_call.1}
  #allocation0 [shape = 'u32[]', space=smem, size = 0x4, offset = 0x4, fixed_abs, tag = 'smem constant byte address 0x4 - core index']
  #allocation1 [shape = 'u32[144,128]{1,0:T(1,128)}', space=vmem, size = 0x12000, scoped, tag = 'internal scratch']
  %s0 = inlined_call_operand.hbm [shape: bf16[8,128], index: 0, kind: input, shape index: {}]
  %s1 = inlined_call_operand.hbm [shape: bf16[128,512], index: 1, kind: input, shape index: {}]
  %s2 = inlined_call_operand.vmem [shape: f32[1,512], index: 2, kind: input, shape index: {}]
  %s3 = inlined_call_operand.hbm [shape: f32[8,512], index: 3, kind: output, shape index: {}]
  %s4 = sld [smem:[#allocation0]]
  $region30: #{tpu_custom_call.1} parent=0
    _
  %s6 = ssub.s32 1, %s4
  %s7 = scalar_select 0, %s6, %s4
  $region1: #{tpu_custom_call.1} parent=0
    #allocation2 [shape = 'u8[2048]{0}', space=vmem, size = 0x800, scoped, tag = 'input window, operand 0, single buffered']
    #allocation3 [shape = 's32[1]{0}', space=sflag, size = 0x4, scoped, tag = 'scoped memory for tpu_custom_call.1']
    #allocation4 [shape = 's32[1]{0}', space=sflag, size = 0x4, scoped, tag = 'scoped memory for tpu_custom_call.1']
    #allocation5 [shape = 'u8[131072]{0}', space=vmem, size = 0x20000, scoped, tag = 'input window, operand 1, single buffered']
    #allocation6 [shape = 's32[1]{0}', space=sflag, size = 0x4, scoped, tag = 'scoped memory for tpu_custom_call.1']
    #allocation7 [shape = 'u8[16384]{0}', space=vmem, size = 0x4000, scoped, tag = 'output window, operand 0, single buffered']
    %8 = vsyncpa [#allocation3], 0
    %9 = vsyncpa [#allocation6], 0
    %10 = vsyncpa [#allocation4], 0
    // Predicated region
    $region2: #{tpu_custom_call.1} parent=1 // pred_check
      _
    $region3: #{tpu_custom_call.1} parent=1 // pred_check_branch
      %12 = sbr.rel (0) target = $region5
    $region4: #{tpu_custom_call.1} parent=1 // pred_region
      %s14 = ssub.s32 64, 64
      %15 = vsyncadd [#allocation3], %s14
      %s17 = sshll.u32 [#allocation2], 4
      %s18 = int_to_ptr.vmem [resolvable:$true] %s17
      %20 = dma.hbm_to_vmem [thread:$0]  %s0, 64, %s18, [#allocation3]
    $region5: #{tpu_custom_call.1} parent=1 // pred_fallthru
      _
    // Predicated region
    $region6: #{tpu_custom_call.1} parent=1 // pred_check
      _
    $region7: #{tpu_custom_call.1} parent=1 // pred_check_branch
      %22 = sbr.rel (0) target = $region9
    $region8: #{tpu_custom_call.1} parent=1 // pred_region
      %s24 = ssub.s32 4096, 4096
      %25 = vsyncadd [#allocation6], %s24
      %s26 = sshll.u32 [#allocation5], 4
      %s27 = int_to_ptr.vmem [resolvable:$true] %s26
      %32 = dma.hbm_to_vmem [thread:$0]  %s1, 4096, %s27, [#allocation6], 256, 256, 16
    $region9: #{tpu_custom_call.1} parent=1 // pred_fallthru
      _
    // Predicated region
    $region10: #{tpu_custom_call.1} parent=1 // pred_check
      _
    $region11: #{tpu_custom_call.1} parent=1 // pred_check_branch
      %34 = sbr.rel (0) target = $region13
    $region12: #{tpu_custom_call.1} parent=1 // pred_region
      _
    $region13: #{tpu_custom_call.1} parent=1 // pred_fallthru
      _
    // Predicated region
    $region14: #{tpu_custom_call.1} parent=1 // pred_check
      _
    $region15: #{tpu_custom_call.1} parent=1 // pred_check_branch
      %36 = sbr.rel (0) target = $region17
    $region16: #{tpu_custom_call.1} parent=1 // pred_region
      %37 = dma.done [#allocation3], 64
    $region17: #{tpu_custom_call.1} parent=1 // pred_fallthru
      _
    // Predicated region
    $region18: #{tpu_custom_call.1} parent=1 // pred_check
      _
    $region19: #{tpu_custom_call.1} parent=1 // pred_check_branch
      %39 = sbr.rel (0) target = $region21
    $region20: #{tpu_custom_call.1} parent=1 // pred_region
      %40 = dma.done [#allocation6], 4096
    $region21: #{tpu_custom_call.1} parent=1 // pred_fallthru
      _
    %v42 = vld [vmem:[#allocation2] sm:$0xf]
    %v43 = vld [vmem:[#allocation5] sm:$0xff]
    %v44 = vld [vmem:[#allocation5 + $0x8] sm:$0xff]
    %v45 = vld [vmem:[#allocation5 + $0x10] sm:$0xff]
    %v46 = vld [vmem:[#allocation5 + $0x18] sm:$0xff]
    %v47 = vld [vmem:[#allocation5 + $0x20] sm:$0xff]
    %v48 = vld [vmem:[#allocation5 + $0x28] sm:$0xff]
    %v49 = vld [vmem:[#allocation5 + $0x30] sm:$0xff]
    %v50 = vld [vmem:[#allocation5 + $0x38] sm:$0xff]
    %v51 = vld [vmem:[#allocation5 + $0x40] sm:$0xff]
    %v52 = vld [vmem:[#allocation5 + $0x48] sm:$0xff]
    %v53 = vld [vmem:[#allocation5 + $0x50] sm:$0xff]
    %v54 = vld [vmem:[#allocation5 + $0x58] sm:$0xff]
    %v55 = vld [vmem:[#allocation5 + $0x60] sm:$0xff]
    %v56 = vld [vmem:[#allocation5 + $0x68] sm:$0xff]
    %v57 = vld [vmem:[#allocation5 + $0x70] sm:$0xff]
    %v58 = vld [vmem:[#allocation5 + $0x78] sm:$0xff]
    %v59 = vld [vmem:[#allocation5 + $0x80] sm:$0xff]
    %v60 = vld [vmem:[#allocation5 + $0x88] sm:$0xff]
    %v61 = vld [vmem:[#allocation5 + $0x90] sm:$0xff]
    %v62 = vld [vmem:[#allocation5 + $0x98] sm:$0xff]
    %v63 = vld [vmem:[#allocation5 + $0xa0] sm:$0xff]
    %v64 = vld [vmem:[#allocation5 + $0xa8] sm:$0xff]
    %v65 = vld [vmem:[#allocation5 + $0xb0] sm:$0xff]
    %v66 = vld [vmem:[#allocation5 + $0xb8] sm:$0xff]
    %v67 = vld [vmem:[#allocation5 + $0xc0] sm:$0xff]
    %v68 = vld [vmem:[#allocation5 + $0xc8] sm:$0xff]
    %v69 = vld [vmem:[#allocation5 + $0xd0] sm:$0xff]
    %v70 = vld [vmem:[#allocation5 + $0xd8] sm:$0xff]
    %v71 = vld [vmem:[#allocation5 + $0xe0] sm:$0xff]
    %v72 = vld [vmem:[#allocation5 + $0xe8] sm:$0xff]
    %v73 = vld [vmem:[#allocation5 + $0xf0] sm:$0xff]
    %v74 = vld [vmem:[#allocation5 + $0xf8] sm:$0xff]
    %v75 = vld [vmem:[%s2] sm:$0xf]
    %v77 = vlaneseq
    %v78 = vshrl.u32 %v77, 7
    %v79 = vsub.s32 0, %v78
    %v80 = vrot.slane %v75, %v79
    %v81 = vlaneseq
    %v82 = vshrl.u32 %v81, 7
    %v83 = vsub.s32 1, %v82
    %v84 = vrot.slane %v75, %v83
    %v85 = vlaneseq
    %v86 = vshrl.u32 %v85, 7
    %v87 = vsub.s32 2, %v86
    %v88 = vrot.slane %v75, %v87
    %v89 = vlaneseq
    %v90 = vshrl.u32 %v89, 7
    %v91 = vsub.s32 3, %v90
    %v92 = vrot.slane %v75, %v91
    %v129 = vunpack.c.l.b16 %v43
    %v130 = vunpack.c.h.b16 %v43
    %v131 = vunpack.c.l.b16 %v44
    %v132 = vunpack.c.h.b16 %v44
    %v133 = vunpack.c.l.b16 %v45
    %v134 = vunpack.c.h.b16 %v45
    %v135 = vunpack.c.l.b16 %v46
    %v136 = vunpack.c.h.b16 %v46
    %v137 = vunpack.c.l.b16 %v47
    %v138 = vunpack.c.h.b16 %v47
    %v139 = vunpack.c.l.b16 %v48
    %v140 = vunpack.c.h.b16 %v48
    %v141 = vunpack.c.l.b16 %v49
    %v142 = vunpack.c.h.b16 %v49
    %v143 = vunpack.c.l.b16 %v50
    %v144 = vunpack.c.h.b16 %v50
    %v145 = vunpack.c.l.b16 %v51
    %v146 = vunpack.c.h.b16 %v51
    %v147 = vunpack.c.l.b16 %v52
    %v148 = vunpack.c.h.b16 %v52
    %v149 = vunpack.c.l.b16 %v53
    %v150 = vunpack.c.h.b16 %v53
    %v151 = vunpack.c.l.b16 %v54
    %v152 = vunpack.c.h.b16 %v54
    %v153 = vunpack.c.l.b16 %v55
    %v154 = vunpack.c.h.b16 %v55
    %v155 = vunpack.c.l.b16 %v56
    %v156 = vunpack.c.h.b16 %v56
    %v157 = vunpack.c.l.b16 %v57
    %v158 = vunpack.c.h.b16 %v57
    %v159 = vunpack.c.l.b16 %v58
    %v160 = vunpack.c.h.b16 %v58
    %v161 = vunpack.c.l.b16 %v59
    %v162 = vunpack.c.h.b16 %v59
    %v163 = vunpack.c.l.b16 %v60
    %v164 = vunpack.c.h.b16 %v60
    %v165 = vunpack.c.l.b16 %v61
    %v166 = vunpack.c.h.b16 %v61
    %v167 = vunpack.c.l.b16 %v62
    %v168 = vunpack.c.h.b16 %v62
    %v169 = vunpack.c.l.b16 %v63
    %v170 = vunpack.c.h.b16 %v63
    %v171 = vunpack.c.l.b16 %v64
    %v172 = vunpack.c.h.b16 %v64
    %v173 = vunpack.c.l.b16 %v65
    %v174 = vunpack.c.h.b16 %v65
    %v175 = vunpack.c.l.b16 %v66
    %v176 = vunpack.c.h.b16 %v66
    %v177 = vunpack.c.l.b16 %v67
    %v178 = vunpack.c.h.b16 %v67
    %v179 = vunpack.c.l.b16 %v68
    %v180 = vunpack.c.h.b16 %v68
    %v181 = vunpack.c.l.b16 %v69
    %v182 = vunpack.c.h.b16 %v69
    %v183 = vunpack.c.l.b16 %v70
    %v184 = vunpack.c.h.b16 %v70
    %v185 = vunpack.c.l.b16 %v71
    %v186 = vunpack.c.h.b16 %v71
    %v187 = vunpack.c.l.b16 %v72
    %v188 = vunpack.c.h.b16 %v72
    %v189 = vunpack.c.l.b16 %v73
    %v190 = vunpack.c.h.b16 %v73
    %v191 = vunpack.c.l.b16 %v74
    %v192 = vunpack.c.h.b16 %v74
    %v193 = vpack.c.b16 %v133, %v129
    %v194 = vpack.c.b16 %v134, %v130
    %v195 = vpack.c.b16 %v135, %v131
    %v196 = vpack.c.b16 %v136, %v132
    %v197 = vpack.c.b16 %v141, %v137
    %v198 = vpack.c.b16 %v142, %v138
    %v199 = vpack.c.b16 %v143, %v139
    %v200 = vpack.c.b16 %v144, %v140
    %v201 = vpack.c.b16 %v149, %v145
    %v202 = vpack.c.b16 %v150, %v146
    %v203 = vpack.c.b16 %v151, %v147
    %v204 = vpack.c.b16 %v152, %v148
    %v205 = vpack.c.b16 %v157, %v153
    %v206 = vpack.c.b16 %v158, %v154
    %v207 = vpack.c.b16 %v159, %v155
    %v208 = vpack.c.b16 %v160, %v156
    %v209 = vpack.c.b16 %v165, %v161
    %v210 = vpack.c.b16 %v166, %v162
    %v211 = vpack.c.b16 %v167, %v163
    %v212 = vpack.c.b16 %v168, %v164
    %v213 = vpack.c.b16 %v173, %v169
    %v214 = vpack.c.b16 %v174, %v170
    %v215 = vpack.c.b16 %v175, %v171
    %v216 = vpack.c.b16 %v176, %v172
    %v217 = vpack.c.b16 %v181, %v177
    %v218 = vpack.c.b16 %v182, %v178
    %v219 = vpack.c.b16 %v183, %v179
    %v220 = vpack.c.b16 %v184, %v180
    %v221 = vpack.c.b16 %v189, %v185
    %v222 = vpack.c.b16 %v190, %v186
    %v223 = vpack.c.b16 %v191, %v187
    %v224 = vpack.c.b16 %v192, %v188
    %257 = vmatprep.subr.bf16.mxu0 %v194
    %258 = vmatpush1.bf16.msra.mxu0 %v193
    %259 = vmatprep.subr.bf16.mxu0 %v198
    %260 = vmatpush1.bf16.msra.mxu0 %v197
    %261 = vmatprep.subr.bf16.mxu0 %v202
    %262 = vmatpush1.bf16.msra.mxu0 %v201
    %263 = vmatprep.subr.bf16.mxu0 %v206
    %264 = vmatpush1.bf16.msra.mxu0 %v205
    %265 = vmatprep.subr.bf16.mxu0 %v210
    %266 = vmatpush1.bf16.msra.mxu0 %v209
    %267 = vmatprep.subr.bf16.mxu0 %v214
    %268 = vmatpush1.bf16.msra.mxu0 %v213
    %269 = vmatprep.subr.bf16.mxu0 %v218
    %270 = vmatpush1.bf16.msra.mxu0 %v217
    %271 = vmatprep.subr.bf16.mxu0 %v222
    %272 = vmatpush1.bf16.msra.mxu0 %v221
    %273 = vmatprep.subr.bf16.mxu0 0
    %274 = vmatpush1.bf16.msra.mxu0 0
    %275 = vmatprep.subr.bf16.mxu0 0
    %276 = vmatpush1.bf16.msra.mxu0 0
    %277 = vmatprep.subr.bf16.mxu0 0
    %278 = vmatpush1.bf16.msra.mxu0 0
    %279 = vmatprep.subr.bf16.mxu0 0
    %280 = vmatpush1.bf16.msra.mxu0 0
    %281 = vmatprep.subr.bf16.mxu0 0
    %282 = vmatpush1.bf16.msra.mxu0 0
    %283 = vmatprep.subr.bf16.mxu0 0
    %284 = vmatpush1.bf16.msra.mxu0 0
    %285 = vmatprep.subr.bf16.mxu0 0
    %286 = vmatpush1.bf16.msra.mxu0 0
    %287 = vmatprep.subr.bf16.mxu0 0
    %288 = vmatpush1.bf16.msra.mxu0 0
    %289 = vmatprep.mubr.bf16.mxu0 0
    %290 = vmatmul.mubr.bf16.gmra.mrb[0].mxu0 %v42
    %v291 = vpop.f32.mrb[0].mxu0
    %v292 = vadd.f32 %v80, %v291
    %v293 = vpop.f32.mrb[0].mxu0
    %v294 = vadd.f32 %v84, %v293
    %v295 = vpop.f32.mrb[0].mxu0
    %v296 = vpop.f32.mrb[0].mxu0
    %297 = vdwg.mxu0
    %298 = vmatprep.subr.bf16.mxu0 %v196
    %299 = vmatpush1.bf16.msra.mxu0 %v195
    %300 = vmatprep.subr.bf16.mxu0 %v200
    %301 = vmatpush1.bf16.msra.mxu0 %v199
    %302 = vmatprep.subr.bf16.mxu0 %v204
    %303 = vmatpush1.bf16.msra.mxu0 %v203
    %304 = vmatprep.subr.bf16.mxu0 %v208
    %305 = vmatpush1.bf16.msra.mxu0 %v207
    %306 = vmatprep.subr.bf16.mxu0 %v212
    %307 = vmatpush1.bf16.msra.mxu0 %v211
    %308 = vmatprep.subr.bf16.mxu0 %v216
    %309 = vmatpush1.bf16.msra.mxu0 %v215
    %310 = vmatprep.subr.bf16.mxu0 %v220
    %311 = vmatpush1.bf16.msra.mxu0 %v219
    %312 = vmatprep.subr.bf16.mxu0 %v224
    %313 = vmatpush1.bf16.msra.mxu0 %v223
    %314 = vmatprep.subr.bf16.mxu0 0
    %315 = vmatpush1.bf16.msra.mxu0 0
    %316 = vmatprep.subr.bf16.mxu0 0
    %317 = vmatpush1.bf16.msra.mxu0 0
    %318 = vmatprep.subr.bf16.mxu0 0
    %319 = vmatpush1.bf16.msra.mxu0 0
    %320 = vmatprep.subr.bf16.mxu0 0
    %321 = vmatpush1.bf16.msra.mxu0 0
    %322 = vmatprep.subr.bf16.mxu0 0
    %323 = vmatpush1.bf16.msra.mxu0 0
    %324 = vmatprep.subr.bf16.mxu0 0
    %325 = vmatpush1.bf16.msra.mxu0 0
    %326 = vmatprep.subr.bf16.mxu0 0
    %327 = vmatpush1.bf16.msra.mxu0 0
    %328 = vmatprep.subr.bf16.mxu0 0
    %329 = vmatpush1.bf16.msra.mxu0 0
    %330 = vmatprep.mubr.bf16.mxu0 0
    %331 = vmatmul.mubr.bf16.gmra.mrb[0].mxu0 %v42
    %v332 = vpop.f32.mrb[0].mxu0
    %v333 = vadd.f32 %v88, %v332
    %v334 = vpop.f32.mrb[0].mxu0
    %v335 = vadd.f32 %v92, %v334
    %v336 = vpop.f32.mrb[0].mxu0
    %v337 = vpop.f32.mrb[0].mxu0
    %338 = vdwg.mxu0
    %339 = vst [vmem:[#allocation7] sm:$0xff] %v292
    %340 = vst [vmem:[#allocation7 + $0x8] sm:$0xff] %v294
    %341 = vst [vmem:[#allocation7 + $0x10] sm:$0xff] %v333
    %342 = vst [vmem:[#allocation7 + $0x18] sm:$0xff] %v335
    // Predicated region
    $region22: #{tpu_custom_call.1} parent=1 // pred_check
      _
    $region23: #{tpu_custom_call.1} parent=1 // pred_check_branch
      %344 = sbr.rel (0) target = $region25
    $region24: #{tpu_custom_call.1} parent=1 // pred_region
      %s346 = ssub.s32 512, 512
      %347 = vsyncadd [#allocation4], %s346
      %s349 = sshll.u32 [#allocation7], 4
      %s350 = int_to_ptr.vmem [resolvable:$true] %s349
      %352 = dma.vmem_to_hbm [thread:$0]  %s350, 512, %s3, [#allocation4]
    $region25: #{tpu_custom_call.1} parent=1 // pred_fallthru
      _
    // Predicated region
    $region26: #{tpu_custom_call.1} parent=1 // pred_check
      _
    $region27: #{tpu_custom_call.1} parent=1 // pred_check_branch
      %354 = sbr.rel (0) target = $region29
    $region28: #{tpu_custom_call.1} parent=1 // pred_region
      %355 = dma.done [#allocation4], 512
    $region29: #{tpu_custom_call.1} parent=1 // pred_fallthru
      _
    %356 = vsyncpa [#allocation3], 1
    %357 = vsyncpa [#allocation6], 1
    %358 = vsyncpa [#allocation4], 1

</llo_original>
